<compile_context>
chip_gen: v7x
topology: tpu7x:2x2x1
jax: 0.10.0
libtpu: 0.0.40
codegen_flags: <defaults>
</compile_context>

<pallas_src>
import functools

import jax
import jax.numpy as jnp
from jax.experimental import pallas as pl
from jax.experimental.pallas import tpu as pltpu


def _layer_norm(x, gamma, beta, eps=1e-5):
    mean = jnp.mean(x, axis=-1, keepdims=True)
    var = jnp.mean((x - mean) ** 2, axis=-1, keepdims=True)
    return (x - mean) * jax.lax.rsqrt(var + eps) * gamma + beta


def _gelu(x):
    # TODO(synk): tanh approximation; PyTorch nn.GELU default is the erf form.
    c = 0.7978845608028654  # sqrt(2/pi)
    return 0.5 * x * (1.0 + jnp.tanh(c * (x + 0.044715 * x * x * x)))


def _attention_kernel(
    x_ref,                       # (S, E)      f32
    wq_ref, bq_ref,              # (E, Dh), (1, Dh)   per-head slices
    wk_ref, bk_ref,
    wv_ref, bv_ref,
    ctx_ref,                     # (S, Dh)     out: per-head context
    attn_ref,                    # (S, S)      out: attention filter
    *, causal,
):
    x = x_ref[...]
    S = x.shape[0]
    Dh = wq_ref.shape[-1]
    scale = 1.0 / (Dh ** 0.5)

    x16 = x.astype(jnp.bfloat16)

    # per-head QKV projections (bf16 operands, f32 accumulate on the MXU)
    q = jnp.dot(x16, wq_ref[...].astype(jnp.bfloat16),
                preferred_element_type=jnp.float32) + bq_ref[...]
    k = jnp.dot(x16, wk_ref[...].astype(jnp.bfloat16),
                preferred_element_type=jnp.float32) + bk_ref[...]
    v = jnp.dot(x16, wv_ref[...].astype(jnp.bfloat16),
                preferred_element_type=jnp.float32) + bv_ref[...]

    scores = jnp.dot(q.astype(jnp.bfloat16), k.astype(jnp.bfloat16).T,
                     preferred_element_type=jnp.float32) * scale

    if causal:
        row = jax.lax.broadcasted_iota(jnp.int32, (S, S), 0)
        col = jax.lax.broadcasted_iota(jnp.int32, (S, S), 1)
        bias = jnp.where(row >= col, jnp.float32(0.0), jnp.float32(-1e9))
        scores = scores + bias            # additive bias (single select), f32

    # softmax (f32; reciprocal on the EUP slot)
    m = jnp.max(scores, axis=-1, keepdims=True)
    e = jnp.exp(scores - m)
    l = jnp.sum(e, axis=-1, keepdims=True)
    probs = e * pl.reciprocal(l, approx=True)

    attn_ref[...] = probs.astype(attn_ref.dtype)
    ctx_ref[...] = jnp.dot(probs.astype(jnp.bfloat16), v.astype(jnp.bfloat16),
                           preferred_element_type=jnp.float32)


def _proj_ffn_kernel(
    x_ref,                        # (tn, E)        residual (tokens, batch folded in)
    ctx_ref,                      # (H, tn, Dh)    per-head context
    wo_ref, bo_ref,               # (H, Dh, E), (1, E)
    ln1g_ref, ln1b_ref,
    w1_ref, b1_ref,               # (E, hidden), (1, hidden)
    w2_ref, b2_ref,               # (hidden, E), (1, E)
    ln2g_ref, ln2b_ref,
    out_ref,                      # (tn, E)
    *, num_heads,
):
    x = x_ref[...]
    tn, E = x.shape

    # output projection: concat(heads) @ Wo  ==  sum_h ctx_h @ Wo_h
    # (no concatenate / head transpose; accumulate into one f32 slab)
    acc = jnp.zeros((tn, E), jnp.float32)
    for h in range(num_heads):
        acc = acc + jnp.dot(ctx_ref[h].astype(jnp.bfloat16),
                            wo_ref[h].astype(jnp.bfloat16),
                            preferred_element_type=jnp.float32)
    attn_out = acc + bo_ref[...]

    # residual + LayerNorm (f32)
    mha_emb = _layer_norm(x + attn_out, ln1g_ref[...], ln1b_ref[...])

    # position-wise feed-forward (bf16 MXU, f32 elementwise) + residual + LayerNorm
    hdn = _gelu(jnp.dot(mha_emb.astype(jnp.bfloat16),
                        w1_ref[...].astype(jnp.bfloat16),
                        preferred_element_type=jnp.float32) + b1_ref[...])
    ffn = jnp.dot(hdn.astype(jnp.bfloat16),
                  w2_ref[...].astype(jnp.bfloat16),
                  preferred_element_type=jnp.float32) + b2_ref[...]
    out_ref[...] = _layer_norm(mha_emb + ffn, ln2g_ref[...], ln2b_ref[...])


def encoder_layer(x, params, *, num_heads, causal=True, attn_dtype=jnp.float32):
    """x: (B, S, E) float32. Returns (out (B,S,E), attn_filters (B,H,S,S))."""
    B, S, E = x.shape
    H = num_heads
    assert E % H == 0, "embedding_dim must be divisible by num_attn_heads"
    Dh = E // H
    hidden = params["w1"].shape[1]

    # Host-side: put the head axis on a leading (grid-indexable) dim of the
    # weights so the kernel never slices the lane dimension by Dh < 128.
    def head_major_in(w):    # (E, E) -> (H, E, Dh), w[:, h*Dh:(h+1)*Dh] == out[h]
        return w.reshape(E, H, Dh).transpose(1, 0, 2)

    def head_major_bias(b):  # (1, E) -> (H, 1, Dh)
        return b.reshape(H, Dh)[:, None, :]

    wq_h, wk_h, wv_h = (head_major_in(params[k]) for k in ("wq", "wk", "wv"))
    bq_h, bk_h, bv_h = (head_major_bias(params[k]) for k in ("bq", "bk", "bv"))
    wo_h = params["wo"].reshape(H, Dh, E)   # rows grouped by head

    # ---------------- kernel 1: attention, grid (B, H) ----------------
    attn_fn = pl.pallas_call(
        functools.partial(_attention_kernel, causal=causal),
        out_shape=(
            jax.ShapeDtypeStruct((H, B, S, Dh), jnp.float32),   # ctx (head-major)
            jax.ShapeDtypeStruct((B, H, S, S), attn_dtype),     # attention filters
        ),
        grid_spec=pltpu.PrefetchScalarGridSpec(
            num_scalar_prefetch=0,
            grid=(B, H),
            in_specs=[
                pl.BlockSpec((None, S, E), lambda b, h: (b, 0, 0)),    # x
                pl.BlockSpec((None, E, Dh), lambda b, h: (h, 0, 0)),   # wq_h
                pl.BlockSpec((None, 1, Dh), lambda b, h: (h, 0, 0)),   # bq_h
                pl.BlockSpec((None, E, Dh), lambda b, h: (h, 0, 0)),   # wk_h
                pl.BlockSpec((None, 1, Dh), lambda b, h: (h, 0, 0)),   # bk_h
                pl.BlockSpec((None, E, Dh), lambda b, h: (h, 0, 0)),   # wv_h
                pl.BlockSpec((None, 1, Dh), lambda b, h: (h, 0, 0)),   # bv_h
            ],
            out_specs=(
                pl.BlockSpec((None, None, S, Dh), lambda b, h: (h, b, 0, 0)),
                pl.BlockSpec((None, None, S, S), lambda b, h: (b, h, 0, 0)),
            ),
        ),
        compiler_params=pltpu.CompilerParams(
            dimension_semantics=("parallel", "parallel")),
    )
    ctx, attn_filters = attn_fn(x, wq_h, bq_h, wk_h, bk_h, wv_h, bv_h)

    # ---------------- kernel 2: output proj + LN + FFN + LN ----------------
    # Fold batch into the row dimension (LN/FFN are per-token); tile tokens.
    N = B * S
    tn = 256 if (N >= 256 and N % 256 == 0) else N
    x_flat = x.reshape(N, E)
    ctx_flat = ctx.reshape(H, N, Dh)   # contiguous reshape (head-major layout)

    full2d = lambda shape: pl.BlockSpec(shape, lambda i: (0,) * len(shape))
    ffn_fn = pl.pallas_call(
        functools.partial(_proj_ffn_kernel, num_heads=H),
        out_shape=jax.ShapeDtypeStruct((N, E), jnp.float32),
        grid_spec=pltpu.PrefetchScalarGridSpec(
            num_scalar_prefetch=0,
            grid=(N // tn,),
            in_specs=[
                pl.BlockSpec((tn, E), lambda i: (i, 0)),           # x (residual)
                pl.BlockSpec((H, tn, Dh), lambda i: (0, i, 0)),    # ctx
                pl.BlockSpec((H, Dh, E), lambda i: (0, 0, 0)),     # wo (head-major)
                full2d((1, E)),                                    # bo
                full2d((1, E)), full2d((1, E)),                    # ln1 gamma, beta
                full2d((E, hidden)), full2d((1, hidden)),          # w1, b1
                full2d((hidden, E)), full2d((1, E)),               # w2, b2
                full2d((1, E)), full2d((1, E)),                    # ln2 gamma, beta
            ],
            out_specs=pl.BlockSpec((tn, E), lambda i: (i, 0)),
        ),
        compiler_params=pltpu.CompilerParams(
            dimension_semantics=("parallel",)),
    )
    out = ffn_fn(
        x_flat, ctx_flat, wo_h, params["bo"],
        params["ln1_g"], params["ln1_b"],
        params["w1"], params["b1"], params["w2"], params["b2"],
        params["ln2_g"], params["ln2_b"],
    )
    return out.reshape(B, S, E), attn_filters


def init_params(key, embedding_dim, hidden_dim):
    E, Hd = embedding_dim, hidden_dim
    ks = jax.random.split(key, 6)
    s = 0.02
    return {
        "wq": s * jax.random.normal(ks[0], (E, E), jnp.float32),
        "wk": s * jax.random.normal(ks[1], (E, E), jnp.float32),
        "wv": s * jax.random.normal(ks[2], (E, E), jnp.float32),
        "wo": s * jax.random.normal(ks[3], (E, E), jnp.float32),
        "w1": s * jax.random.normal(ks[4], (E, Hd), jnp.float32),
        "w2": s * jax.random.normal(ks[5], (Hd, E), jnp.float32),
        "bq": jnp.zeros((1, E), jnp.float32),
        "bk": jnp.zeros((1, E), jnp.float32),
        "bv": jnp.zeros((1, E), jnp.float32),
        "bo": jnp.zeros((1, E), jnp.float32),
        "b1": jnp.zeros((1, Hd), jnp.float32),
        "b2": jnp.zeros((1, E), jnp.float32),
        "ln1_g": jnp.ones((1, E), jnp.float32),
        "ln1_b": jnp.zeros((1, E), jnp.float32),
        "ln2_g": jnp.ones((1, E), jnp.float32),
        "ln2_b": jnp.zeros((1, E), jnp.float32),
    }


if __name__ == "__main__":
    # Small shapes consistent with the module: B=2, seq=8, embedding_dim=32,
    # hidden_dim=64, num_attn_heads=4, causal attention.
    B, S, E, HID, NH = 2, 8, 32, 64, 4

    key = jax.random.PRNGKey(0)
    k_x, k_p = jax.random.split(key)
    x = jax.random.normal(k_x, (B, S, E), jnp.float32)
    params = init_params(k_p, E, HID)

    out, attn_filters = encoder_layer(x, params, num_heads=NH, causal=True)
    out = jax.block_until_ready(out)
    attn_filters = jax.block_until_ready(attn_filters)

    assert out.shape == (B, S, E)
    assert attn_filters.shape == (B, NH, S, S)
    print("KERNEL_OK")
</pallas_src>

<mosaic_0001>
module attributes {stable_mosaic.version = 11 : i64} {
  func.func @_attention_kernel(%arg0: i32, %arg1: i32, %arg2: memref<1x8x32xf32, #tpu.memory_space<vmem>>, %arg3: memref<1x32x8xf32, #tpu.memory_space<vmem>>, %arg4: memref<1x1x8xf32, #tpu.memory_space<vmem>>, %arg5: memref<1x32x8xf32, #tpu.memory_space<vmem>>, %arg6: memref<1x1x8xf32, #tpu.memory_space<vmem>>, %arg7: memref<1x32x8xf32, #tpu.memory_space<vmem>>, %arg8: memref<1x1x8xf32, #tpu.memory_space<vmem>>, %arg9: memref<1x1x8x8xf32, #tpu.memory_space<vmem>>, %arg10: memref<1x1x8x8xf32, #tpu.memory_space<vmem>>) attributes {dimension_semantics = [#tpu.dimension_semantics<parallel>, #tpu.dimension_semantics<parallel>], iteration_bounds = array<i64: 2, 4>, scalar_prefetch = 0 : i64, scratch_operands = 0 : i64, tpu.core_type = #tpu.core_type<tc>, window_params = [{transform_indices = @transform_0, window_bounds = array<i64: 1, 8, 32>}, {transform_indices = @transform_1, window_bounds = array<i64: 1, 32, 8>}, {transform_indices = @transform_2, window_bounds = array<i64: 1, 1, 8>}, {transform_indices = @transform_3, window_bounds = array<i64: 1, 32, 8>}, {transform_indices = @transform_4, window_bounds = array<i64: 1, 1, 8>}, {transform_indices = @transform_5, window_bounds = array<i64: 1, 32, 8>}, {transform_indices = @transform_6, window_bounds = array<i64: 1, 1, 8>}, {transform_indices = @transform_7, window_bounds = array<i64: 1, 1, 8, 8>}, {transform_indices = @transform_8, window_bounds = array<i64: 1, 1, 8, 8>}]} {
    %c0 = arith.constant 0 : index
    %c0_0 = arith.constant 0 : index
    %c0_1 = arith.constant 0 : index
    %0 = vector.load %arg2[%c0, %c0_0, %c0_1] : memref<1x8x32xf32, #tpu.memory_space<vmem>>, vector<1x8x32xf32>
    %1 = vector.shape_cast %0 : vector<1x8x32xf32> to vector<8x32xf32>
    %2 = arith.truncf %1 : vector<8x32xf32> to vector<8x32xbf16>
    %c0_2 = arith.constant 0 : index
    %c0_3 = arith.constant 0 : index
    %c0_4 = arith.constant 0 : index
    %3 = vector.load %arg3[%c0_2, %c0_3, %c0_4] : memref<1x32x8xf32, #tpu.memory_space<vmem>>, vector<1x32x8xf32>
    %4 = vector.shape_cast %3 : vector<1x32x8xf32> to vector<32x8xf32>
    %5 = arith.truncf %4 : vector<32x8xf32> to vector<32x8xbf16>
    %cst = arith.constant dense<0.000000e+00> : vector<8x8xf32>
    %6 = tpu.matmul %2, %5, %cst {dimension_numbers = #tpu.dot_dimension_numbers<[1], [0], [0], [1], [0, 0, 1, 1], [], []>} : vector<8x32xbf16>, vector<32x8xbf16>, vector<8x8xf32> -> vector<8x8xf32>
    %c0_5 = arith.constant 0 : index
    %c0_6 = arith.constant 0 : index
    %c0_7 = arith.constant 0 : index
    %7 = vector.load %arg4[%c0_5, %c0_6, %c0_7] : memref<1x1x8xf32, #tpu.memory_space<vmem>>, vector<1x1x8xf32>
    %8 = vector.shape_cast %7 : vector<1x1x8xf32> to vector<1x8xf32>
    %9 = vector.broadcast %8 : vector<1x8xf32> to vector<8x8xf32>
    %10 = arith.addf %6, %9 : vector<8x8xf32>
    %c0_8 = arith.constant 0 : index
    %c0_9 = arith.constant 0 : index
    %c0_10 = arith.constant 0 : index
    %11 = vector.load %arg5[%c0_8, %c0_9, %c0_10] : memref<1x32x8xf32, #tpu.memory_space<vmem>>, vector<1x32x8xf32>
    %12 = vector.shape_cast %11 : vector<1x32x8xf32> to vector<32x8xf32>
    %13 = arith.truncf %12 : vector<32x8xf32> to vector<32x8xbf16>
    %cst_11 = arith.constant dense<0.000000e+00> : vector<8x8xf32>
    %14 = tpu.matmul %2, %13, %cst_11 {dimension_numbers = #tpu.dot_dimension_numbers<[1], [0], [0], [1], [0, 0, 1, 1], [], []>} : vector<8x32xbf16>, vector<32x8xbf16>, vector<8x8xf32> -> vector<8x8xf32>
    %c0_12 = arith.constant 0 : index
    %c0_13 = arith.constant 0 : index
    %c0_14 = arith.constant 0 : index
    %15 = vector.load %arg6[%c0_12, %c0_13, %c0_14] : memref<1x1x8xf32, #tpu.memory_space<vmem>>, vector<1x1x8xf32>
    %16 = vector.shape_cast %15 : vector<1x1x8xf32> to vector<1x8xf32>
    %17 = vector.broadcast %16 : vector<1x8xf32> to vector<8x8xf32>
    %18 = arith.addf %14, %17 : vector<8x8xf32>
    %c0_15 = arith.constant 0 : index
    %c0_16 = arith.constant 0 : index
    %c0_17 = arith.constant 0 : index
    %19 = vector.load %arg7[%c0_15, %c0_16, %c0_17] : memref<1x32x8xf32, #tpu.memory_space<vmem>>, vector<1x32x8xf32>
    %20 = vector.shape_cast %19 : vector<1x32x8xf32> to vector<32x8xf32>
    %21 = arith.truncf %20 : vector<32x8xf32> to vector<32x8xbf16>
    %cst_18 = arith.constant dense<0.000000e+00> : vector<8x8xf32>
    %22 = tpu.matmul %2, %21, %cst_18 {dimension_numbers = #tpu.dot_dimension_numbers<[1], [0], [0], [1], [0, 0, 1, 1], [], []>} : vector<8x32xbf16>, vector<32x8xbf16>, vector<8x8xf32> -> vector<8x8xf32>
    %c0_19 = arith.constant 0 : index
    %c0_20 = arith.constant 0 : index
    %c0_21 = arith.constant 0 : index
    %23 = vector.load %arg8[%c0_19, %c0_20, %c0_21] : memref<1x1x8xf32, #tpu.memory_space<vmem>>, vector<1x1x8xf32>
    %24 = vector.shape_cast %23 : vector<1x1x8xf32> to vector<1x8xf32>
    %25 = vector.broadcast %24 : vector<1x8xf32> to vector<8x8xf32>
    %26 = arith.addf %22, %25 : vector<8x8xf32>
    %27 = arith.truncf %10 : vector<8x8xf32> to vector<8x8xbf16>
    %28 = arith.truncf %18 : vector<8x8xf32> to vector<8x8xbf16>
    %29 = tpu.transpose %28, [1, 0] : vector<8x8xbf16> -> vector<8x8xbf16>
    %cst_22 = arith.constant dense<0.000000e+00> : vector<8x8xf32>
    %30 = tpu.matmul %27, %29, %cst_22 {dimension_numbers = #tpu.dot_dimension_numbers<[1], [0], [0], [1], [0, 0, 1, 1], [], []>} : vector<8x8xbf16>, vector<8x8xbf16>, vector<8x8xf32> -> vector<8x8xf32>
    %cst_23 = arith.constant 0.353553385 : f32
    %31 = vector.broadcast %cst_23 : f32 to vector<8x8xf32>
    %32 = arith.mulf %30, %31 : vector<8x8xf32>
    %33 = tpu.iota {dimensions = array<i32: 0>} : vector<8x8xi32>
    %34 = tpu.iota {dimensions = array<i32: 1>} : vector<8x8xi32>
    %35 = arith.cmpi sge, %33, %34 : vector<8x8xi32>
    %cst_24 = arith.constant 0.000000e+00 : f32
    %cst_25 = arith.constant -1.000000e+09 : f32
    %36 = vector.broadcast %cst_24 : f32 to vector<8x8xf32>
    %37 = vector.broadcast %cst_25 : f32 to vector<8x8xf32>
    %38 = arith.select %35, %36, %37 : vector<8x8xi1>, vector<8x8xf32>
    %39 = arith.addf %32, %38 : vector<8x8xf32>
    %cst_26 = arith.constant dense<0xFF800000> : vector<8xf32>
    %40 = vector.multi_reduction <maximumf>, %39, %cst_26 [1] : vector<8x8xf32> to vector<8xf32>
    %41 = vector.shape_cast %40 : vector<8xf32> to vector<8x1xf32>
    %42 = vector.broadcast %41 : vector<8x1xf32> to vector<8x8xf32>
    %43 = arith.subf %39, %42 : vector<8x8xf32>
    %44 = math.exp %43 : vector<8x8xf32>
    %cst_27 = arith.constant dense<0.000000e+00> : vector<8xf32>
    %45 = vector.multi_reduction <add>, %44, %cst_27 [1] : vector<8x8xf32> to vector<8xf32>
    %46 = vector.shape_cast %45 : vector<8xf32> to vector<8x1xf32>
    %47 = tpu.reciprocal %46 {approx = true} : vector<8x1xf32> -> vector<8x1xf32>
    %48 = vector.broadcast %47 : vector<8x1xf32> to vector<8x8xf32>
    %49 = arith.mulf %44, %48 : vector<8x8xf32>
    %c0_28 = arith.constant 0 : index
    %c0_29 = arith.constant 0 : index
    %c0_30 = arith.constant 0 : index
    %c0_31 = arith.constant 0 : index
    %50 = vector.load %arg10[%c0_28, %c0_29, %c0_30, %c0_31] : memref<1x1x8x8xf32, #tpu.memory_space<vmem>>, vector<1x1x8x8xf32>
    %51 = vector.shape_cast %50 : vector<1x1x8x8xf32> to vector<8x8xf32>
    %52 = vector.shape_cast %49 : vector<8x8xf32> to vector<1x1x8x8xf32>
    tpu.vector_store %arg10[%c0_28, %c0_29, %c0_30, %c0_31], %52 {strides = array<i32>} : memref<1x1x8x8xf32, #tpu.memory_space<vmem>>, vector<1x1x8x8xf32>,
    %53 = arith.truncf %49 : vector<8x8xf32> to vector<8x8xbf16>
    %54 = arith.truncf %26 : vector<8x8xf32> to vector<8x8xbf16>
    %cst_32 = arith.constant dense<0.000000e+00> : vector<8x8xf32>
    %55 = tpu.matmul %53, %54, %cst_32 {dimension_numbers = #tpu.dot_dimension_numbers<[1], [0], [0], [1], [0, 0, 1, 1], [], []>} : vector<8x8xbf16>, vector<8x8xbf16>, vector<8x8xf32> -> vector<8x8xf32>
    %c0_33 = arith.constant 0 : index
    %c0_34 = arith.constant 0 : index
    %c0_35 = arith.constant 0 : index
    %c0_36 = arith.constant 0 : index
    %56 = vector.load %arg9[%c0_33, %c0_34, %c0_35, %c0_36] : memref<1x1x8x8xf32, #tpu.memory_space<vmem>>, vector<1x1x8x8xf32>
    %57 = vector.shape_cast %56 : vector<1x1x8x8xf32> to vector<8x8xf32>
    %58 = vector.shape_cast %55 : vector<8x8xf32> to vector<1x1x8x8xf32>
    tpu.vector_store %arg9[%c0_33, %c0_34, %c0_35, %c0_36], %58 {strides = array<i32>} : memref<1x1x8x8xf32, #tpu.memory_space<vmem>>, vector<1x1x8x8xf32>,
    return
  }
  func.func @transform_0(%arg0: i32, %arg1: i32) -> (i32, i32, i32) {
    %c0_i32 = arith.constant 0 : i32
    %c0_i32_0 = arith.constant 0 : i32
    %c0_i32_1 = arith.constant 0 : i32
    return %arg0, %c0_i32, %c0_i32_0 : i32, i32, i32
  }
  func.func @transform_1(%arg0: i32, %arg1: i32) -> (i32, i32, i32) {
    %c0_i32 = arith.constant 0 : i32
    %c0_i32_0 = arith.constant 0 : i32
    %c0_i32_1 = arith.constant 0 : i32
    return %arg1, %c0_i32, %c0_i32_0 : i32, i32, i32
  }
  func.func @transform_2(%arg0: i32, %arg1: i32) -> (i32, i32, i32) {
    %c0_i32 = arith.constant 0 : i32
    %c0_i32_0 = arith.constant 0 : i32
    %c0_i32_1 = arith.constant 0 : i32
    return %arg1, %c0_i32, %c0_i32_0 : i32, i32, i32
  }
  func.func @transform_3(%arg0: i32, %arg1: i32) -> (i32, i32, i32) {
    %c0_i32 = arith.constant 0 : i32
    %c0_i32_0 = arith.constant 0 : i32
    %c0_i32_1 = arith.constant 0 : i32
    return %arg1, %c0_i32, %c0_i32_0 : i32, i32, i32
  }
  func.func @transform_4(%arg0: i32, %arg1: i32) -> (i32, i32, i32) {
    %c0_i32 = arith.constant 0 : i32
    %c0_i32_0 = arith.constant 0 : i32
    %c0_i32_1 = arith.constant 0 : i32
    return %arg1, %c0_i32, %c0_i32_0 : i32, i32, i32
  }
  func.func @transform_5(%arg0: i32, %arg1: i32) -> (i32, i32, i32) {
    %c0_i32 = arith.constant 0 : i32
    %c0_i32_0 = arith.constant 0 : i32
    %c0_i32_1 = arith.constant 0 : i32
    return %arg1, %c0_i32, %c0_i32_0 : i32, i32, i32
  }
  func.func @transform_6(%arg0: i32, %arg1: i32) -> (i32, i32, i32) {
    %c0_i32 = arith.constant 0 : i32
    %c0_i32_0 = arith.constant 0 : i32
    %c0_i32_1 = arith.constant 0 : i32
    return %arg1, %c0_i32, %c0_i32_0 : i32, i32, i32
  }
  func.func @transform_7(%arg0: i32, %arg1: i32) -> (i32, i32, i32, i32) {
    %c0_i32 = arith.constant 0 : i32
    %c0_i32_0 = arith.constant 0 : i32
    %c0_i32_1 = arith.constant 0 : i32
    return %arg1, %arg0, %c0_i32, %c0_i32_0 : i32, i32, i32, i32
  }
  func.func @transform_8(%arg0: i32, %arg1: i32) -> (i32, i32, i32, i32) {
    %c0_i32 = arith.constant 0 : i32
    %c0_i32_0 = arith.constant 0 : i32
    %c0_i32_1 = arith.constant 0 : i32
    return %arg0, %arg1, %c0_i32, %c0_i32_0 : i32, i32, i32, i32
  }
}

</mosaic_0001>

<llo_original>
// kernel: tpu_custom_call.1
$region0: #{tpu_custom_call.1}
  #allocation0 [shape = 'u32[]', space=smem, size = 0x4, offset = 0x4, fixed_abs, tag = 'smem constant byte address 0x4 - core index']
  #allocation1 [shape = 'u32[144,128]{1,0:T(1,128)}', space=vmem, size = 0x12000, scoped, tag = 'internal scratch']
  %s0 = inlined_call_operand.vmem [shape: f32[2,8,32], index: 0, kind: input, shape index: {}]
  %s1 = inlined_call_operand.vmem [shape: f32[4,32,8], index: 1, kind: input, shape index: {}]
  %s2 = inlined_call_operand.vmem [shape: f32[4,1,8], index: 2, kind: input, shape index: {}]
  %s3 = inlined_call_operand.vmem [shape: f32[4,32,8], index: 3, kind: input, shape index: {}]
  %s4 = inlined_call_operand.vmem [shape: f32[4,1,8], index: 4, kind: input, shape index: {}]
  %s5 = inlined_call_operand.vmem [shape: f32[4,32,8], index: 5, kind: input, shape index: {}]
  %s6 = inlined_call_operand.vmem [shape: f32[4,1,8], index: 6, kind: input, shape index: {}]
  %s7 = inlined_call_operand.hbm [shape: f32[4,2,8,8], index: 7, kind: output, shape index: {0}]
  %s8 = inlined_call_operand.hbm [shape: f32[2,4,8,8], index: 8, kind: output, shape index: {1}]
  %9 = xla_tuple %s7, %s8
  %s10 = sld [smem:[#allocation0]]
  $region69: #{tpu_custom_call.1} parent=0
    _
  %s12 = ssub.s32 1, %s10
  %s13 = scalar_select 0, %s12, %s10
  $region1: #{tpu_custom_call.1} parent=0
    #allocation2 [shape = 'u8[8192]{0}', space=vmem, size = 0x2000, scoped, tag = 'output window, operand 0']
    #allocation3 [shape = 's32[2]{0}', space=sflag, size = 0x8, scoped, tag = 'scoped memory for tpu_custom_call.1']
    #allocation4 [shape = 'u8[8192]{0}', space=vmem, size = 0x2000, scoped, tag = 'output window, operand 1']
    #allocation5 [shape = 's32[2]{0}', space=sflag, size = 0x8, scoped, tag = 'scoped memory for tpu_custom_call.1']
    %14 = vsyncpa [#allocation3], 0
    %s15 = scalar_lea.sflag [#allocation3], 1
    %16 = vsyncpa %s15, 0
    %17 = vsyncpa [#allocation5], 0
    %s18 = scalar_lea.sflag [#allocation5], 1
    %19 = vsyncpa %s18, 0
    loop: start=0, step=1, limit=10
    $region2: #{tpu_custom_call.1} parent=1 // loop_pre_header
      _
    $region3: #{tpu_custom_call.1} parent=1 // loop_header
      %s21 = sphi 0, %s25
      %p22 = scmp.ge.s32.totalorder %s21, 10
      %s28 = sphi 0, %s40
      %s29 = sphi 0, %s36
      %s30 = sphi 0, %s28
      %s31 = sphi 0, %s29
      %s32 = sphi 0, %s30
      %s33 = sphi 0, %s31
      %s43 = sphi 0, %s45
      %s46 = sphi 0, %s43
      %s47 = sphi 0, %s46
      %s63 = sphi 0, %s47
      %s69 = sphi 0, %s71
      %s72 = sphi 0, %s69
      %s73 = sphi 0, %s72
      %s89 = sphi 0, %s73
      %s95 = sphi 0, %s97
      %s98 = sphi 0, %s95
      %s99 = sphi 0, %s98
      %s115 = sphi 0, %s99
      %s121 = sphi 0, %s123
      %s124 = sphi 0, %s121
      %s125 = sphi 0, %s124
      %s141 = sphi 0, %s125
      %s147 = sphi 0, %s149
      %s150 = sphi 0, %s147
      %s151 = sphi 0, %s150
      %s167 = sphi 0, %s151
      %s173 = sphi 0, %s175
      %s176 = sphi 0, %s173
      %s177 = sphi 0, %s176
      %s193 = sphi 0, %s177
      %s199 = sphi 0, %s201
      %s202 = sphi 0, %s199
      %s203 = sphi 0, %s202
      %s219 = sphi 0, %s203
      %s227 = sphi 0, %s229
      %s230 = sphi 0, %s227
      %s231 = sphi 0, %s230
      %s247 = sphi 0, %s231
      %s255 = sphi 0, %s257
      %s258 = sphi 0, %s255
      %s259 = sphi 0, %s258
      %s275 = sphi 0, %s259
    $region4: #{tpu_custom_call.1} parent=1 // loop_header_branch
      %24 = sbr.rel (%p22) target = $region8
    $region5: #{tpu_custom_call.1} parent=1 // loop_body
      %s26 = ssub.s32 %s21, 1
      %s27 = ssub.s32 %s21, 2
      %s34 = sadd.s32 1, %s29
      %p35 = scmp.ge.s32.totalorder %s34, 4
      %s36 = scalar_select %p35, 0, %s34
      %s37 = sadd.s32 1, %s28
      %s38 = scalar_select %p35, %s37, %s28
      %p39 = scmp.ge.s32.totalorder %s38, 2
      %s40 = scalar_select %p39, 0, %s38
      %s41 = ssub.s32 %s28, %s40
      %p42 = scmp.eq.s32.totalorder %s41, 0
      %s44 = sadd.s32 %s43, 1
      %s45 = scalar_select %p42, %s43, %s44
      %p48 = pneg %p42
      %p49 = scmp.eq.s32.totalorder %s21, 7
      %p50 = por %p48, %p49
      %p51 = scmp.ne.s32.totalorder %s43, %s46
      %p52 = scmp.eq.s32.totalorder %s21, 0
      %p53 = por %p51, %p52
      %p54 = scmp.ne.s32.totalorder %s43, %s46
      %p55 = scmp.eq.s32.totalorder %s26, 7
      %p56 = por %p54, %p55
      %p57 = scmp.ne.s32.totalorder %s46, %s47
      %p58 = scmp.eq.s32.totalorder %s26, 0
      %p59 = por %p57, %p58
      %p60 = scmp.ne.s32.totalorder %s46, %s47
      %p61 = scmp.eq.s32.totalorder %s27, 7
      %p62 = por %p60, %p61
      %p64 = scmp.ne.s32.totalorder %s47, %s63
      %p65 = scmp.eq.s32.totalorder %s27, 0
      %p66 = por %p64, %p65
      %s67 = ssub.s32 %s29, %s36
      %p68 = scmp.eq.s32.totalorder %s67, 0
      %s70 = sadd.s32 %s69, 1
      %s71 = scalar_select %p68, %s69, %s70
      %p74 = pneg %p68
      %p75 = scmp.eq.s32.totalorder %s21, 7
      %p76 = por %p74, %p75
      %p77 = scmp.ne.s32.totalorder %s69, %s72
      %p78 = scmp.eq.s32.totalorder %s21, 0
      %p79 = por %p77, %p78
      %p80 = scmp.ne.s32.totalorder %s69, %s72
      %p81 = scmp.eq.s32.totalorder %s26, 7
      %p82 = por %p80, %p81
      %p83 = scmp.ne.s32.totalorder %s72, %s73
      %p84 = scmp.eq.s32.totalorder %s26, 0
      %p85 = por %p83, %p84
      %p86 = scmp.ne.s32.totalorder %s72, %s73
      %p87 = scmp.eq.s32.totalorder %s27, 7
      %p88 = por %p86, %p87
      %p90 = scmp.ne.s32.totalorder %s73, %s89
      %p91 = scmp.eq.s32.totalorder %s27, 0
      %p92 = por %p90, %p91
      %s93 = ssub.s32 %s29, %s36
      %p94 = scmp.eq.s32.totalorder %s93, 0
      %s96 = sadd.s32 %s95, 1
      %s97 = scalar_select %p94, %s95, %s96
      %p100 = pneg %p94
      %p101 = scmp.eq.s32.totalorder %s21, 7
      %p102 = por %p100, %p101
      %p103 = scmp.ne.s32.totalorder %s95, %s98
      %p104 = scmp.eq.s32.totalorder %s21, 0
      %p105 = por %p103, %p104
      %p106 = scmp.ne.s32.totalorder %s95, %s98
      %p107 = scmp.eq.s32.totalorder %s26, 7
      %p108 = por %p106, %p107
      %p109 = scmp.ne.s32.totalorder %s98, %s99
      %p110 = scmp.eq.s32.totalorder %s26, 0
      %p111 = por %p109, %p110
      %p112 = scmp.ne.s32.totalorder %s98, %s99
      %p113 = scmp.eq.s32.totalorder %s27, 7
      %p114 = por %p112, %p113
      %p116 = scmp.ne.s32.totalorder %s99, %s115
      %p117 = scmp.eq.s32.totalorder %s27, 0
      %p118 = por %p116, %p117
      %s119 = ssub.s32 %s29, %s36
      %p120 = scmp.eq.s32.totalorder %s119, 0
      %s122 = sadd.s32 %s121, 1
      %s123 = scalar_select %p120, %s121, %s122
      %p126 = pneg %p120
      %p127 = scmp.eq.s32.totalorder %s21, 7
      %p128 = por %p126, %p127
      %p129 = scmp.ne.s32.totalorder %s121, %s124
      %p130 = scmp.eq.s32.totalorder %s21, 0
      %p131 = por %p129, %p130
      %p132 = scmp.ne.s32.totalorder %s121, %s124
      %p133 = scmp.eq.s32.totalorder %s26, 7
      %p134 = por %p132, %p133
      %p135 = scmp.ne.s32.totalorder %s124, %s125
      %p136 = scmp.eq.s32.totalorder %s26, 0
      %p137 = por %p135, %p136
      %p138 = scmp.ne.s32.totalorder %s124, %s125
      %p139 = scmp.eq.s32.totalorder %s27, 7
      %p140 = por %p138, %p139
      %p142 = scmp.ne.s32.totalorder %s125, %s141
      %p143 = scmp.eq.s32.totalorder %s27, 0
      %p144 = por %p142, %p143
      %s145 = ssub.s32 %s29, %s36
      %p146 = scmp.eq.s32.totalorder %s145, 0
      %s148 = sadd.s32 %s147, 1
      %s149 = scalar_select %p146, %s147, %s148
      %p152 = pneg %p146
      %p153 = scmp.eq.s32.totalorder %s21, 7
      %p154 = por %p152, %p153
      %p155 = scmp.ne.s32.totalorder %s147, %s150
      %p156 = scmp.eq.s32.totalorder %s21, 0
      %p157 = por %p155, %p156
      %p158 = scmp.ne.s32.totalorder %s147, %s150
      %p159 = scmp.eq.s32.totalorder %s26, 7
      %p160 = por %p158, %p159
      %p161 = scmp.ne.s32.totalorder %s150, %s151
      %p162 = scmp.eq.s32.totalorder %s26, 0
      %p163 = por %p161, %p162
      %p164 = scmp.ne.s32.totalorder %s150, %s151
      %p165 = scmp.eq.s32.totalorder %s27, 7
      %p166 = por %p164, %p165
      %p168 = scmp.ne.s32.totalorder %s151, %s167
      %p169 = scmp.eq.s32.totalorder %s27, 0
      %p170 = por %p168, %p169
      %s171 = ssub.s32 %s29, %s36
      %p172 = scmp.eq.s32.totalorder %s171, 0
      %s174 = sadd.s32 %s173, 1
      %s175 = scalar_select %p172, %s173, %s174
      %p178 = pneg %p172
      %p179 = scmp.eq.s32.totalorder %s21, 7
      %p180 = por %p178, %p179
      %p181 = scmp.ne.s32.totalorder %s173, %s176
      %p182 = scmp.eq.s32.totalorder %s21, 0
      %p183 = por %p181, %p182
      %p184 = scmp.ne.s32.totalorder %s173, %s176
      %p185 = scmp.eq.s32.totalorder %s26, 7
      %p186 = por %p184, %p185
      %p187 = scmp.ne.s32.totalorder %s176, %s177
      %p188 = scmp.eq.s32.totalorder %s26, 0
      %p189 = por %p187, %p188
      %p190 = scmp.ne.s32.totalorder %s176, %s177
      %p191 = scmp.eq.s32.totalorder %s27, 7
      %p192 = por %p190, %p191
      %p194 = scmp.ne.s32.totalorder %s177, %s193
      %p195 = scmp.eq.s32.totalorder %s27, 0
      %p196 = por %p194, %p195
      %s197 = ssub.s32 %s29, %s36
      %p198 = scmp.eq.s32.totalorder %s197, 0
      %s200 = sadd.s32 %s199, 1
      %s201 = scalar_select %p198, %s199, %s200
      %p204 = pneg %p198
      %p205 = scmp.eq.s32.totalorder %s21, 7
      %p206 = por %p204, %p205
      %p207 = scmp.ne.s32.totalorder %s199, %s202
      %p208 = scmp.eq.s32.totalorder %s21, 0
      %p209 = por %p207, %p208
      %p210 = scmp.ne.s32.totalorder %s199, %s202
      %p211 = scmp.eq.s32.totalorder %s26, 7
      %p212 = por %p210, %p211
      %p213 = scmp.ne.s32.totalorder %s202, %s203
      %p214 = scmp.eq.s32.totalorder %s26, 0
      %p215 = por %p213, %p214
      %p216 = scmp.ne.s32.totalorder %s202, %s203
      %p217 = scmp.eq.s32.totalorder %s27, 7
      %p218 = por %p216, %p217
      %p220 = scmp.ne.s32.totalorder %s203, %s219
      %p221 = scmp.eq.s32.totalorder %s27, 0
      %p222 = por %p220, %p221
      %s223 = ssub.s32 %s29, %s36
      %s224 = ssub.s32 %s28, %s40
      %s225 = sor.u32 %s223, %s224
      %p226 = scmp.eq.s32.totalorder %s225, 0
      %s228 = sadd.s32 %s227, 1
      %s229 = scalar_select %p226, %s227, %s228
      %p232 = pneg %p226
      %p233 = scmp.eq.s32.totalorder %s21, 7
      %p234 = por %p232, %p233
      %p235 = scmp.ne.s32.totalorder %s227, %s230
      %p236 = scmp.eq.s32.totalorder %s21, 0
      %p237 = por %p235, %p236
      %p238 = scmp.ne.s32.totalorder %s227, %s230
      %p239 = scmp.eq.s32.totalorder %s26, 7
      %p240 = por %p238, %p239
      %p241 = scmp.ne.s32.totalorder %s230, %s231
      %p242 = scmp.eq.s32.totalorder %s26, 0
      %p243 = por %p241, %p242
      %p244 = scmp.ne.s32.totalorder %s230, %s231
      %p245 = scmp.eq.s32.totalorder %s27, 7
      %p246 = por %p244, %p245
      %p248 = scmp.ne.s32.totalorder %s231, %s247
      %p249 = scmp.eq.s32.totalorder %s27, 0
      %p250 = por %p248, %p249
      %s251 = ssub.s32 %s28, %s40
      %s252 = ssub.s32 %s29, %s36
      %s253 = sor.u32 %s251, %s252
      %p254 = scmp.eq.s32.totalorder %s253, 0
      %s256 = sadd.s32 %s255, 1
      %s257 = scalar_select %p254, %s255, %s256
      %p260 = pneg %p254
      %p261 = scmp.eq.s32.totalorder %s21, 7
      %p262 = por %p260, %p261
      %p263 = scmp.ne.s32.totalorder %s255, %s258
      %p264 = scmp.eq.s32.totalorder %s21, 0
      %p265 = por %p263, %p264
      %p266 = scmp.ne.s32.totalorder %s255, %s258
      %p267 = scmp.eq.s32.totalorder %s26, 7
      %p268 = por %p266, %p267
      %p269 = scmp.ne.s32.totalorder %s258, %s259
      %p270 = scmp.eq.s32.totalorder %s26, 0
      %p271 = por %p269, %p270
      %p272 = scmp.ne.s32.totalorder %s258, %s259
      %p273 = scmp.eq.s32.totalorder %s27, 7
      %p274 = por %p272, %p273
      %p276 = scmp.ne.s32.totalorder %s259, %s275
      %p277 = scmp.eq.s32.totalorder %s27, 0
      %p278 = por %p276, %p277
      %p279 = scmp.le.s32.totalorder 1, %s21
      %p280 = scmp.lt.s32.totalorder %s21, 9
      %p281 = pnand %p279, %p280
      %p282 = pneg %p281
      // Predicated region
      $region9: #{tpu_custom_call.1} parent=5 // pred_check
        _
      $region10: #{tpu_custom_call.1} parent=5 // pred_check_branch
        %284 = sbr.rel (%p281) target = $region12
      $region11: #{tpu_custom_call.1} parent=5 // pred_region
        %s285 = ssub.s32 %s21, 1
      $region12: #{tpu_custom_call.1} parent=5 // pred_fallthru
        _
      %p286 = scmp.lt.s32.totalorder %s21, 8
      // Predicated region
      $region13: #{tpu_custom_call.1} parent=5 // pred_check
        %p287 = pneg %p286
      $region14: #{tpu_custom_call.1} parent=5 // pred_check_branch
        %289 = sbr.rel (%p287) target = $region16
      $region15: #{tpu_custom_call.1} parent=5 // pred_region
        // Predicated region
        $region17: #{tpu_custom_call.1} parent=15 // pred_check
          %p290 = pneg %p53
        $region18: #{tpu_custom_call.1} parent=15 // pred_check_branch
          %292 = sbr.rel (%p290) target = $region20
        $region19: #{tpu_custom_call.1} parent=15 // pred_region
          %p293 = scmp.lt.s32.totalorder %s28, 1
          %s294 = scalar_select %p293, %s28, 1
          %s295 = smul.addr %s294, 8
          %s296 = scalar_lea.vmem %s0, %s295
        $region20: #{tpu_custom_call.1} parent=15 // pred_fallthru
          _
        // Predicated region
        $region21: #{tpu_custom_call.1} parent=15 // pred_check
          %p297 = pneg %p79
        $region22: #{tpu_custom_call.1} parent=15 // pred_check_branch
          %299 = sbr.rel (%p297) target = $region24
        $region23: #{tpu_custom_call.1} parent=15 // pred_region
          %p300 = scmp.lt.s32.totalorder %s29, 3
          %s301 = scalar_select %p300, %s29, 3
          %s302 = smul.addr %s301, 4
          %s303 = smul.addr %s302, 8
          %s304 = scalar_lea.vmem %s1, %s303
        $region24: #{tpu_custom_call.1} parent=15 // pred_fallthru
          _
        // Predicated region
        $region25: #{tpu_custom_call.1} parent=15 // pred_check
          %p305 = pneg %p105
        $region26: #{tpu_custom_call.1} parent=15 // pred_check_branch
          %307 = sbr.rel (%p305) target = $region28
        $region27: #{tpu_custom_call.1} parent=15 // pred_region
          %p308 = scmp.lt.s32.totalorder %s29, 3
          %s309 = scalar_select %p308, %s29, 3
          %s310 = scalar_lea.vmem %s2, %s309
        $region28: #{tpu_custom_call.1} parent=15 // pred_fallthru
          _
        // Predicated region
        $region29: #{tpu_custom_call.1} parent=15 // pred_check
          %p311 = pneg %p131
        $region30: #{tpu_custom_call.1} parent=15 // pred_check_branch
          %313 = sbr.rel (%p311) target = $region32
        $region31: #{tpu_custom_call.1} parent=15 // pred_region
          %p314 = scmp.lt.s32.totalorder %s29, 3
          %s315 = scalar_select %p314, %s29, 3
          %s316 = smul.addr %s315, 4
          %s317 = smul.addr %s316, 8
          %s318 = scalar_lea.vmem %s3, %s317
        $region32: #{tpu_custom_call.1} parent=15 // pred_fallthru
          _
        // Predicated region
        $region33: #{tpu_custom_call.1} parent=15 // pred_check
          %p319 = pneg %p157
        $region34: #{tpu_custom_call.1} parent=15 // pred_check_branch
          %321 = sbr.rel (%p319) target = $region36
        $region35: #{tpu_custom_call.1} parent=15 // pred_region
          %p322 = scmp.lt.s32.totalorder %s29, 3
          %s323 = scalar_select %p322, %s29, 3
          %s324 = scalar_lea.vmem %s4, %s323
        $region36: #{tpu_custom_call.1} parent=15 // pred_fallthru
          _
        // Predicated region
        $region37: #{tpu_custom_call.1} parent=15 // pred_check
          %p325 = pneg %p183
        $region38: #{tpu_custom_call.1} parent=15 // pred_check_branch
          %327 = sbr.rel (%p325) target = $region40
        $region39: #{tpu_custom_call.1} parent=15 // pred_region
          %p328 = scmp.lt.s32.totalorder %s29, 3
          %s329 = scalar_select %p328, %s29, 3
          %s330 = smul.addr %s329, 4
          %s331 = smul.addr %s330, 8
          %s332 = scalar_lea.vmem %s5, %s331
        $region40: #{tpu_custom_call.1} parent=15 // pred_fallthru
          _
        // Predicated region
        $region41: #{tpu_custom_call.1} parent=15 // pred_check
          %p333 = pneg %p209
        $region42: #{tpu_custom_call.1} parent=15 // pred_check_branch
          %335 = sbr.rel (%p333) target = $region44
        $region43: #{tpu_custom_call.1} parent=15 // pred_region
          %p336 = scmp.lt.s32.totalorder %s29, 3
          %s337 = scalar_select %p336, %s29, 3
          %s338 = scalar_lea.vmem %s6, %s337
        $region44: #{tpu_custom_call.1} parent=15 // pred_fallthru
          _
      $region16: #{tpu_custom_call.1} parent=5 // pred_fallthru
        _
      %p339 = scmp.le.s32.totalorder 1, %s21
      %p340 = scmp.lt.s32.totalorder %s21, 9
      %p341 = pnand %p339, %p340
      %p342 = pneg %p341
      // Predicated region
      $region45: #{tpu_custom_call.1} parent=5 // pred_check
        _
      $region46: #{tpu_custom_call.1} parent=5 // pred_check_branch
        %344 = sbr.rel (%p341) target = $region48
      $region47: #{tpu_custom_call.1} parent=5 // pred_region
        %s345 = ssub.s32 %s21, 1
        %p346 = scmp.lt.s32.totalorder %s30, 1
        %s347 = scalar_select %p346, %s30, 1
        %s348 = smul.addr %s347, 8
        %s349 = scalar_lea.vmem %s0, %s348
        %p350 = pneg %p59
        %p351 = pneg %p56
        %p352 = scmp.lt.s32.totalorder %s31, 3
        %s353 = scalar_select %p352, %s31, 3
        %s354 = smul.addr %s353, 4
        %s355 = smul.addr %s354, 8
        %s356 = scalar_lea.vmem %s1, %s355
        %p357 = pneg %p85
        %p358 = pneg %p82
        %p359 = scmp.lt.s32.totalorder %s31, 3
        %s360 = scalar_select %p359, %s31, 3
        %s361 = scalar_lea.vmem %s2, %s360
        %p362 = pneg %p111
        %p363 = pneg %p108
        %p364 = scmp.lt.s32.totalorder %s31, 3
        %s365 = scalar_select %p364, %s31, 3
        %s366 = smul.addr %s365, 4
        %s367 = smul.addr %s366, 8
        %s368 = scalar_lea.vmem %s3, %s367
        %p369 = pneg %p137
        %p370 = pneg %p134
        %p371 = scmp.lt.s32.totalorder %s31, 3
        %s372 = scalar_select %p371, %s31, 3
        %s373 = scalar_lea.vmem %s4, %s372
        %p374 = pneg %p163
        %p375 = pneg %p160
        %p376 = scmp.lt.s32.totalorder %s31, 3
        %s377 = scalar_select %p376, %s31, 3
        %s378 = smul.addr %s377, 4
        %s379 = smul.addr %s378, 8
        %s380 = scalar_lea.vmem %s5, %s379
        %p381 = pneg %p189
        %p382 = pneg %p186
        %p383 = scmp.lt.s32.totalorder %s31, 3
        %s384 = scalar_select %p383, %s31, 3
        %s385 = scalar_lea.vmem %s6, %s384
        %p386 = pneg %p215
        %p387 = pneg %p212
        %p388 = pneg %p243
        %p389 = pneg %p240
        %s390 = sand.u32 %s230, 1
        %s391 = scalar_lea.sflag [#allocation3], %s390
        %s392 = sand.u32 %s230, 1
        %s393 = smul.addr %s392, 8
        %s394 = scalar_lea.vmem [#allocation2], %s393
        %p395 = pneg %p271
        %p396 = pneg %p268
        %s397 = sand.u32 %s258, 1
        %s398 = scalar_lea.sflag [#allocation5], %s397
        %s399 = sand.u32 %s258, 1
        %s400 = smul.addr %s399, 8
        %s401 = scalar_lea.vmem [#allocation4], %s400
        %p402 = scmp.lt.s32.totalorder %s30, 1
        %s403 = scalar_select %p402, %s30, 1
        %s404 = smul.addr %s403, 8
        %s405 = scalar_lea.vmem %s0, %s404
        %p406 = scmp.lt.s32.totalorder %s31, 3
        %s407 = scalar_select %p406, %s31, 3
        %s408 = smul.addr %s407, 4
        %s409 = smul.addr %s408, 8
        %s410 = scalar_lea.vmem %s1, %s409
        %p411 = scmp.lt.s32.totalorder %s31, 3
        %s412 = scalar_select %p411, %s31, 3
        %s413 = scalar_lea.vmem %s2, %s412
        %p414 = scmp.lt.s32.totalorder %s31, 3
        %s415 = scalar_select %p414, %s31, 3
        %s416 = smul.addr %s415, 4
        %s417 = smul.addr %s416, 8
        %s418 = scalar_lea.vmem %s3, %s417
        %p419 = scmp.lt.s32.totalorder %s31, 3
        %s420 = scalar_select %p419, %s31, 3
        %s421 = scalar_lea.vmem %s4, %s420
        %p422 = scmp.lt.s32.totalorder %s31, 3
        %s423 = scalar_select %p422, %s31, 3
        %s424 = smul.addr %s423, 4
        %s425 = smul.addr %s424, 8
        %s426 = scalar_lea.vmem %s5, %s425
        %p427 = scmp.lt.s32.totalorder %s31, 3
        %s428 = scalar_select %p427, %s31, 3
        %s429 = scalar_lea.vmem %s6, %s428
        %v431 = vld [vmem:[%s405] sm:$0xff]
        %v432 = vpack.c.bf16 %v431, %v431
        %v433 = vld [vmem:[%s410] sm:$0xff]
        %v434 = vld [vmem:[%s410 + $0x8] sm:$0xff]
        %v435 = vld [vmem:[%s410 + $0x10] sm:$0xff]
        %v436 = vld [vmem:[%s410 + $0x18] sm:$0xff]
        %v437 = vpack.c.bf16 %v434, %v433
        %v438 = vpack.c.bf16 %v436, %v435
        %v439 = vld [vmem:[%s413] sm:$0x1]
        %v441 = vlaneseq
        %v442 = vshrl.u32 %v441, 7
        %v443 = vsub.s32 0, %v442
        %v444 = vrot.slane %v439, %v443
        %vm446 = vcmask 261120
        %v448 = vsel %vm446, %v432, 0
        %450 = vmatprep.subr.bf16.mxu0 0
        %451 = vmatpush1.bf16.msra.mxu0 %v437
        %452 = vmatprep.subr.bf16.mxu0 0
        %453 = vmatpush1.bf16.msra.mxu0 %v438
        %454 = vmatprep.subr.bf16.mxu0 0
        %455 = vmatpush1.bf16.msra.mxu0 0
        %456 = vmatprep.subr.bf16.mxu0 0
        %457 = vmatpush1.bf16.msra.mxu0 0
        %458 = vmatprep.subr.bf16.mxu0 0
        %459 = vmatpush1.bf16.msra.mxu0 0
        %460 = vmatprep.subr.bf16.mxu0 0
        %461 = vmatpush1.bf16.msra.mxu0 0
        %462 = vmatprep.subr.bf16.mxu0 0
        %463 = vmatpush1.bf16.msra.mxu0 0
        %464 = vmatprep.subr.bf16.mxu0 0
        %465 = vmatpush1.bf16.msra.mxu0 0
        %466 = vmatprep.subr.bf16.mxu0 0
        %467 = vmatpush1.bf16.msra.mxu0 0
        %468 = vmatprep.subr.bf16.mxu0 0
        %469 = vmatpush1.bf16.msra.mxu0 0
        %470 = vmatprep.subr.bf16.mxu0 0
        %471 = vmatpush1.bf16.msra.mxu0 0
        %472 = vmatprep.subr.bf16.mxu0 0
        %473 = vmatpush1.bf16.msra.mxu0 0
        %474 = vmatprep.subr.bf16.mxu0 0
        %475 = vmatpush1.bf16.msra.mxu0 0
        %476 = vmatprep.subr.bf16.mxu0 0
        %477 = vmatpush1.bf16.msra.mxu0 0
        %478 = vmatprep.subr.bf16.mxu0 0
        %479 = vmatpush1.bf16.msra.mxu0 0
        %480 = vmatprep.subr.bf16.mxu0 0
        %481 = vmatpush1.bf16.msra.mxu0 0
        %482 = vmatprep.mubr.bf16.mxu0 0
        %483 = vmatmul.mubr.bf16.gmra.mrb[0].mxu0 %v448
        %v484 = vpop.f32.mrb[0].mxu0
        %v485 = vadd.f32 %v444, %v484
        %v486 = vpop.f32.mrb[0].mxu0
        %v487 = vpop.f32.mrb[0].mxu0
        %v488 = vpop.f32.mrb[0].mxu0
        %489 = vdwg.mxu0
        %v490 = vld [vmem:[%s418] sm:$0xff]
        %v491 = vld [vmem:[%s418 + $0x8] sm:$0xff]
        %v492 = vld [vmem:[%s418 + $0x10] sm:$0xff]
        %v493 = vld [vmem:[%s418 + $0x18] sm:$0xff]
        %v494 = vpack.c.bf16 %v491, %v490
        %v495 = vpack.c.bf16 %v493, %v492
        %v496 = vld [vmem:[%s421] sm:$0x1]
        %v498 = vlaneseq
        %v499 = vshrl.u32 %v498, 7
        %v500 = vsub.s32 0, %v499
        %v501 = vrot.slane %v496, %v500
        %503 = vmatprep.subr.bf16.mxu0 0
        %504 = vmatpush1.bf16.msra.mxu0 %v494
        %505 = vmatprep.subr.bf16.mxu0 0
        %506 = vmatpush1.bf16.msra.mxu0 %v495
        %507 = vmatprep.subr.bf16.mxu0 0
        %508 = vmatpush1.bf16.msra.mxu0 0
        %509 = vmatprep.subr.bf16.mxu0 0
        %510 = vmatpush1.bf16.msra.mxu0 0
        %511 = vmatprep.subr.bf16.mxu0 0
        %512 = vmatpush1.bf16.msra.mxu0 0
        %513 = vmatprep.subr.bf16.mxu0 0
        %514 = vmatpush1.bf16.msra.mxu0 0
        %515 = vmatprep.subr.bf16.mxu0 0
        %516 = vmatpush1.bf16.msra.mxu0 0
        %517 = vmatprep.subr.bf16.mxu0 0
        %518 = vmatpush1.bf16.msra.mxu0 0
        %519 = vmatprep.subr.bf16.mxu0 0
        %520 = vmatpush1.bf16.msra.mxu0 0
        %521 = vmatprep.subr.bf16.mxu0 0
        %522 = vmatpush1.bf16.msra.mxu0 0
        %523 = vmatprep.subr.bf16.mxu0 0
        %524 = vmatpush1.bf16.msra.mxu0 0
        %525 = vmatprep.subr.bf16.mxu0 0
        %526 = vmatpush1.bf16.msra.mxu0 0
        %527 = vmatprep.subr.bf16.mxu0 0
        %528 = vmatpush1.bf16.msra.mxu0 0
        %529 = vmatprep.subr.bf16.mxu0 0
        %530 = vmatpush1.bf16.msra.mxu0 0
        %531 = vmatprep.subr.bf16.mxu0 0
        %532 = vmatpush1.bf16.msra.mxu0 0
        %533 = vmatprep.subr.bf16.mxu0 0
        %534 = vmatpush1.bf16.msra.mxu0 0
        %535 = vmatprep.mubr.bf16.mxu0 0
        %536 = vmatmul.mubr.bf16.gmra.mrb[0].mxu0 %v448
        %v537 = vpop.f32.mrb[0].mxu0
        %v538 = vadd.f32 %v501, %v537
        %v539 = vpop.f32.mrb[0].mxu0
        %v540 = vpop.f32.mrb[0].mxu0
        %v541 = vpop.f32.mrb[0].mxu0
        %542 = vdwg.mxu0
        %v543 = vld [vmem:[%s426] sm:$0xff]
        %v544 = vld [vmem:[%s426 + $0x8] sm:$0xff]
        %v545 = vld [vmem:[%s426 + $0x10] sm:$0xff]
        %v546 = vld [vmem:[%s426 + $0x18] sm:$0xff]
        %v547 = vpack.c.bf16 %v544, %v543
        %v548 = vpack.c.bf16 %v546, %v545
        %v549 = vld [vmem:[%s429] sm:$0x1]
        %v551 = vlaneseq
        %v552 = vshrl.u32 %v551, 7
        %v553 = vsub.s32 0, %v552
        %v554 = vrot.slane %v549, %v553
        %556 = vmatprep.subr.bf16.mxu0 0
        %557 = vmatpush1.bf16.msra.mxu0 %v547
        %558 = vmatprep.subr.bf16.mxu0 0
        %559 = vmatpush1.bf16.msra.mxu0 %v548
        %560 = vmatprep.subr.bf16.mxu0 0
        %561 = vmatpush1.bf16.msra.mxu0 0
        %562 = vmatprep.subr.bf16.mxu0 0
        %563 = vmatpush1.bf16.msra.mxu0 0
        %564 = vmatprep.subr.bf16.mxu0 0
        %565 = vmatpush1.bf16.msra.mxu0 0
        %566 = vmatprep.subr.bf16.mxu0 0
        %567 = vmatpush1.bf16.msra.mxu0 0
        %568 = vmatprep.subr.bf16.mxu0 0
        %569 = vmatpush1.bf16.msra.mxu0 0
        %570 = vmatprep.subr.bf16.mxu0 0
        %571 = vmatpush1.bf16.msra.mxu0 0
        %572 = vmatprep.subr.bf16.mxu0 0
        %573 = vmatpush1.bf16.msra.mxu0 0
        %574 = vmatprep.subr.bf16.mxu0 0
        %575 = vmatpush1.bf16.msra.mxu0 0
        %576 = vmatprep.subr.bf16.mxu0 0
        %577 = vmatpush1.bf16.msra.mxu0 0
        %578 = vmatprep.subr.bf16.mxu0 0
        %579 = vmatpush1.bf16.msra.mxu0 0
        %580 = vmatprep.subr.bf16.mxu0 0
        %581 = vmatpush1.bf16.msra.mxu0 0
        %582 = vmatprep.subr.bf16.mxu0 0
        %583 = vmatpush1.bf16.msra.mxu0 0
        %584 = vmatprep.subr.bf16.mxu0 0
        %585 = vmatpush1.bf16.msra.mxu0 0
        %586 = vmatprep.subr.bf16.mxu0 0
        %587 = vmatpush1.bf16.msra.mxu0 0
        %588 = vmatprep.mubr.bf16.mxu0 0
        %589 = vmatmul.mubr.bf16.gmra.mrb[0].mxu0 %v448
        %v590 = vpop.f32.mrb[0].mxu0
        %v591 = vadd.f32 %v554, %v590
        %v592 = vpop.f32.mrb[0].mxu0
        %v593 = vpop.f32.mrb[0].mxu0
        %v594 = vpop.f32.mrb[0].mxu0
        %595 = vdwg.mxu0
        %v596 = vpack.c.bf16 %v485, %v485
        %v597 = vpack.c.bf16 %v538, %v538
        %vm598 = vcmask 64512
        %v600 = vsel %vm598, %v596, 0
        %v603 = vsel %vm598, %v597, 0
        %605 = vmatprep.subr.bf16.mxu0 0
        %606 = vmatpush1.bf16.xpose.msra.mxu0 %v603
        %607 = vmatprep.subr.bf16.mxu0 0
        %608 = vmatpush1.bf16.xpose.msra.mxu0 0
        %609 = vmatprep.subr.bf16.mxu0 0
        %610 = vmatpush1.bf16.xpose.msra.mxu0 0
        %611 = vmatprep.subr.bf16.mxu0 0
        %612 = vmatpush1.bf16.xpose.msra.mxu0 0
        %613 = vmatprep.subr.bf16.mxu0 0
        %614 = vmatpush1.bf16.xpose.msra.mxu0 0
        %615 = vmatprep.subr.bf16.mxu0 0
        %616 = vmatpush1.bf16.xpose.msra.mxu0 0
        %617 = vmatprep.subr.bf16.mxu0 0
        %618 = vmatpush1.bf16.xpose.msra.mxu0 0
        %619 = vmatprep.subr.bf16.mxu0 0
        %620 = vmatpush1.bf16.xpose.msra.mxu0 0
        %621 = vmatprep.subr.bf16.mxu0 0
        %622 = vmatpush1.bf16.xpose.msra.mxu0 0
        %623 = vmatprep.subr.bf16.mxu0 0
        %624 = vmatpush1.bf16.xpose.msra.mxu0 0
        %625 = vmatprep.subr.bf16.mxu0 0
        %626 = vmatpush1.bf16.xpose.msra.mxu0 0
        %627 = vmatprep.subr.bf16.mxu0 0
        %628 = vmatpush1.bf16.xpose.msra.mxu0 0
        %629 = vmatprep.subr.bf16.mxu0 0
        %630 = vmatpush1.bf16.xpose.msra.mxu0 0
        %631 = vmatprep.subr.bf16.mxu0 0
        %632 = vmatpush1.bf16.xpose.msra.mxu0 0
        %633 = vmatprep.subr.bf16.mxu0 0
        %634 = vmatpush1.bf16.xpose.msra.mxu0 0
        %635 = vmatprep.subr.bf16.mxu0 0
        %636 = vmatpush1.bf16.xpose.msra.mxu0 0
        %637 = vmatprep.mubr.bf16.mxu0 0
        %638 = vmatmul.mubr.bf16.gmra.mrb[0].mxu0 %v600
        %v639 = vpop.f32.mrb[0].mxu0
        %v640 = vadd.f32 0.0, %v639
        %v641 = vpop.f32.mrb[0].mxu0
        %v642 = vpop.f32.mrb[0].mxu0
        %v643 = vpop.f32.mrb[0].mxu0
        %644 = vdwg.mxu0
        %v645 = vmul.f32 %v640, 0.35355338
        %v646 = vlaneseq
        %v647 = vshrl.u32 %v646, 7
        %v648 = vlaneseq
        %v649 = vand.u32 %v648, 127
        %vm650 = vcmp.ge.s32.totalorder %v647, %v649
        %v651 = vsel %vm650, 0.0, -1e+09
        %v652 = vadd.f32 %v645, %v651
        %v653 = vsel %vm598, %v652, -inf
        %654 = vmax.xlane.f32.xlu0 %v653
        %v655 = vpop.xlane.xlu0 %654
        %v656 = vsub.f32 %v652, %v655
        %v657 = vmul.f32 %v656, 1.442695
        %v658 = vpow.pop %v657
        %v659 = vsel %vm598, %v658, 0.0
        %660 = vadd.xlane.f32.xlu0 %v659
        %v661 = vpop.xlane.xlu0 %660
        %v662 = vrcp.pop %v661
        %v663 = vmul.f32 %v658, %v662
        %664 = vst.msk [vmem:[%s401] sm:$0xff] %vm598, %v663
        %v665 = vpack.c.bf16 %v663, %v663
        %v666 = vpack.c.bf16 %v591, %v591
        %v668 = vsel %vm598, %v665, 0
        %vm670 = vcmask 1043456
        %v672 = vsel %vm670, %v666, 0
        %674 = vmatprep.subr.bf16.mxu0 0
        %675 = vmatpush1.bf16.msra.mxu0 %v672
        %676 = vmatprep.subr.bf16.mxu0 0
        %677 = vmatpush1.bf16.msra.mxu0 0
        %678 = vmatprep.subr.bf16.mxu0 0
        %679 = vmatpush1.bf16.msra.mxu0 0
        %680 = vmatprep.subr.bf16.mxu0 0
        %681 = vmatpush1.bf16.msra.mxu0 0
        %682 = vmatprep.subr.bf16.mxu0 0
        %683 = vmatpush1.bf16.msra.mxu0 0
        %684 = vmatprep.subr.bf16.mxu0 0
        %685 = vmatpush1.bf16.msra.mxu0 0
        %686 = vmatprep.subr.bf16.mxu0 0
        %687 = vmatpush1.bf16.msra.mxu0 0
        %688 = vmatprep.subr.bf16.mxu0 0
        %689 = vmatpush1.bf16.msra.mxu0 0
        %690 = vmatprep.subr.bf16.mxu0 0
        %691 = vmatpush1.bf16.msra.mxu0 0
        %692 = vmatprep.subr.bf16.mxu0 0
        %693 = vmatpush1.bf16.msra.mxu0 0
        %694 = vmatprep.subr.bf16.mxu0 0
        %695 = vmatpush1.bf16.msra.mxu0 0
        %696 = vmatprep.subr.bf16.mxu0 0
        %697 = vmatpush1.bf16.msra.mxu0 0
        %698 = vmatprep.subr.bf16.mxu0 0
        %699 = vmatpush1.bf16.msra.mxu0 0
        %700 = vmatprep.subr.bf16.mxu0 0
        %701 = vmatpush1.bf16.msra.mxu0 0
        %702 = vmatprep.subr.bf16.mxu0 0
        %703 = vmatpush1.bf16.msra.mxu0 0
        %704 = vmatprep.subr.bf16.mxu0 0
        %705 = vmatpush1.bf16.msra.mxu0 0
        %706 = vmatprep.mubr.bf16.mxu0 0
        %707 = vmatmul.mubr.bf16.gmra.mrb[0].mxu0 %v668
        %v708 = vpop.f32.mrb[0].mxu0
        %v709 = vadd.f32 0.0, %v708
        %v710 = vpop.f32.mrb[0].mxu0
        %v711 = vpop.f32.mrb[0].mxu0
        %v712 = vpop.f32.mrb[0].mxu0
        %713 = vdwg.mxu0
        %714 = vst.msk [vmem:[%s394] sm:$0xff] %vm598, %v709
        %s715 = sand.u32 %s230, 1
        %s716 = scalar_lea.sflag [#allocation3], %s715
        %s717 = sand.u32 %s230, 1
        %s718 = smul.addr %s717, 8
        %s719 = scalar_lea.vmem [#allocation2], %s718
        %s720 = sand.u32 %s258, 1
        %s721 = scalar_lea.sflag [#allocation5], %s720
        %s722 = sand.u32 %s258, 1
        %s723 = smul.addr %s722, 8
        %s724 = scalar_lea.vmem [#allocation4], %s723
        // Predicated region
        $region49: #{tpu_custom_call.1} parent=47 // pred_check
          %p725 = pneg %p240
        $region50: #{tpu_custom_call.1} parent=47 // pred_check_branch
          %727 = sbr.rel (%p725) target = $region52
        $region51: #{tpu_custom_call.1} parent=47 // pred_region
          %s729 = ssub.s32 128, 128
          %730 = vsyncadd %s716, %s729
          %s731 = smul.addr %s31, 2
          %s732 = sadd.s32 %s30, %s731
          %s733 = smul.addr %s732, 128
          %s734 = scalar_lea.hbm %s7, %s733
          %s736 = sshll.u32 %s719, 4
          %s737 = int_to_ptr.vmem [resolvable:$true] %s736
          %739 = dma.vmem_to_hbm [thread:$0]  %s737, 128, %s734, %s716
        $region52: #{tpu_custom_call.1} parent=47 // pred_fallthru
          _
        // Predicated region
        $region53: #{tpu_custom_call.1} parent=47 // pred_check
          %p740 = pneg %p268
        $region54: #{tpu_custom_call.1} parent=47 // pred_check_branch
          %742 = sbr.rel (%p740) target = $region56
        $region55: #{tpu_custom_call.1} parent=47 // pred_region
          %s744 = ssub.s32 128, 128
          %745 = vsyncadd %s721, %s744
          %s746 = smul.addr %s30, 4
          %s747 = sadd.s32 %s31, %s746
          %s748 = smul.addr %s747, 128
          %s749 = scalar_lea.hbm %s8, %s748
          %s751 = sshll.u32 %s724, 4
          %s752 = int_to_ptr.vmem [resolvable:$true] %s751
          %754 = dma.vmem_to_hbm [thread:$0]  %s752, 128, %s749, %s721
        $region56: #{tpu_custom_call.1} parent=47 // pred_fallthru
          _
      $region48: #{tpu_custom_call.1} parent=5 // pred_fallthru
        _
      %p755 = scmp.le.s32.totalorder 2, %s21
      // Predicated region
      $region57: #{tpu_custom_call.1} parent=5 // pred_check
        %p756 = pneg %p755
      $region58: #{tpu_custom_call.1} parent=5 // pred_check_branch
        %758 = sbr.rel (%p756) target = $region60
      $region59: #{tpu_custom_call.1} parent=5 // pred_region
        %s759 = ssub.s32 %s21, 2
        // Predicated region
        $region61: #{tpu_custom_call.1} parent=59 // pred_check
          %p760 = pneg %p246
        $region62: #{tpu_custom_call.1} parent=59 // pred_check_branch
          %762 = sbr.rel (%p760) target = $region64
        $region63: #{tpu_custom_call.1} parent=59 // pred_region
          %s763 = sand.u32 %s231, 1
          %s764 = scalar_lea.sflag [#allocation3], %s763
          %s765 = sand.u32 %s231, 1
          %s766 = smul.addr %s765, 8
          %s767 = scalar_lea.vmem [#allocation2], %s766
          %768 = dma.done %s764, 128
        $region64: #{tpu_custom_call.1} parent=59 // pred_fallthru
          _
        // Predicated region
        $region65: #{tpu_custom_call.1} parent=59 // pred_check
          %p769 = pneg %p274
        $region66: #{tpu_custom_call.1} parent=59 // pred_check_branch
          %771 = sbr.rel (%p769) target = $region68
        $region67: #{tpu_custom_call.1} parent=59 // pred_region
          %s772 = sand.u32 %s259, 1
          %s773 = scalar_lea.sflag [#allocation5], %s772
          %s774 = sand.u32 %s259, 1
          %s775 = smul.addr %s774, 8
          %s776 = scalar_lea.vmem [#allocation4], %s775
          %777 = dma.done %s773, 128
        $region68: #{tpu_custom_call.1} parent=59 // pred_fallthru
          _
      $region60: #{tpu_custom_call.1} parent=5 // pred_fallthru
        _
    $region6: #{tpu_custom_call.1} parent=1 // loop_footer
      %s25 = sadd.s32 1, %s21
    $region7: #{tpu_custom_call.1} parent=1 // loop_footer_branch
      %20 = sbr.rel target = $region3
    $region8: #{tpu_custom_call.1} parent=1 // loop_exit
      _
    %778 = vsyncpa [#allocation3], 1
    %s779 = scalar_lea.sflag [#allocation3], 1
    %780 = vsyncpa %s779, 1
    %781 = vsyncpa [#allocation5], 1
    %s782 = scalar_lea.sflag [#allocation5], 1
    %783 = vsyncpa %s782, 1

</llo_original>
